<compile_context>
chip_gen: v5e
topology: v5e:2x2
jax: 0.10.0
libtpu: 0.0.40
codegen_flags: <defaults>
</compile_context>

<pallas_src>
import functools

import jax
import jax.numpy as jnp
from jax import lax
from jax.experimental import pallas as pl
from jax.experimental.pallas import tpu as pltpu


def _round_up(x, m):
    return ((x + m - 1) // m) * m


def _sdpa_kernel(n_keys, tk, needs_mask,
                 scale_ref, q_ref, k_ref, v_ref, o_ref,
                 m_sc, l_sc, acc_sc):
    # q_ref:(1,tq,Dp)  k_ref:(1,tk,Dp)  v_ref:(1,tk,Dvp)  o_ref:(1,tq,Dvp)
    ki = pl.program_id(2)

    @pl.when(ki == 0)
    def _init():
        m_sc[...] = jnp.full_like(m_sc, -1e30)
        l_sc[...] = jnp.zeros_like(l_sc)
        acc_sc[...] = jnp.zeros_like(acc_sc)

    # Fold the scale into Q (tq x D work) instead of scaling tq x tk scores.
    scale = scale_ref[0]
    q = (q_ref[0] * scale).astype(q_ref.dtype)        # (tq, Dp)
    k = k_ref[0]                                      # (tk, Dp)

    # Q @ K^T without an explicit transpose: contract the last dim of both.
    s = lax.dot_general(q, k, (((1,), (1,)), ((), ())),
                        preferred_element_type=jnp.float32)  # (tq, tk) f32

    if needs_mask:
        col = ki * tk + lax.broadcasted_iota(jnp.int32, s.shape, 1)
        s = jnp.where(col < n_keys, s, -1e30)

    m_prev = m_sc[...]
    m_new = jnp.maximum(m_prev, jnp.max(s, axis=-1, keepdims=True))
    alpha = jnp.exp(m_prev - m_new)
    p = jnp.exp(s - m_new)

    l_sc[...] = alpha * l_sc[...] + jnp.sum(p, axis=-1, keepdims=True)
    acc_sc[...] = alpha * acc_sc[...] + jnp.dot(
        p.astype(v_ref.dtype), v_ref[0], preferred_element_type=jnp.float32)
    m_sc[...] = m_new

    @pl.when(ki == pl.num_programs(2) - 1)
    def _finalize():
        inv_l = pl.reciprocal(l_sc[...], approx=True)   # EUP slot
        o_ref[0] = (acc_sc[...] * inv_l).astype(o_ref.dtype)


def sdpa(Q, K, V, seq_len, attention_mask=None, dropout_p=0.0):
    assert dropout_p == 0.0, "dropout path not implemented"
    # attention_mask mirrors the nn.Module signature but is never used by the
    # reference module, so it is ignored here too.

    B, M, D = Q.shape
    Bk, N, Dk = K.shape
    Bv, Nv, Dv = V.shape
    assert B == Bk == Bv and D == Dk and N == Nv

    out_dtype = jnp.result_type(Q.dtype, K.dtype, V.dtype)

    # Lane-dense last dims (multiples of 128), sublane-aligned tiles.
    Dp = _round_up(D, 128)
    Dvp = _round_up(Dv, 128)
    tq = min(256, _round_up(M, 8))        # query tile (sublane dim)
    Mp = _round_up(M, tq)
    tk = min(512, _round_up(N, 128))      # key tile
    Np = _round_up(N, tk)
    needs_mask = Np != N

    if Mp != M or Dp != D:
        Q = jnp.pad(Q, ((0, 0), (0, Mp - M), (0, Dp - D)))
    if Np != N or Dp != D:
        K = jnp.pad(K, ((0, 0), (0, Np - N), (0, Dp - D)))
    if Np != N or Dvp != Dv:
        V = jnp.pad(V, ((0, 0), (0, Np - N), (0, Dvp - Dv)))

    # Scale lives in SMEM so different seq_len values reuse one compiled kernel.
    scale = jnp.asarray([float(seq_len) ** 0.5], dtype=jnp.float32)

    kernel = functools.partial(_sdpa_kernel, N, tk, needs_mask)
    grid = (B, Mp // tq, Np // tk)

    out = pl.pallas_call(
        kernel,
        out_shape=jax.ShapeDtypeStruct((B, Mp, Dvp), out_dtype),
        grid_spec=pltpu.PrefetchScalarGridSpec(
            num_scalar_prefetch=0,
            grid=grid,
            in_specs=[
                pl.BlockSpec(memory_space=pltpu.MemorySpace.SMEM),        # scale
                pl.BlockSpec((1, tq, Dp), lambda b, qi, ki: (b, qi, 0)),  # Q
                pl.BlockSpec((1, tk, Dp), lambda b, qi, ki: (b, ki, 0)),  # K
                pl.BlockSpec((1, tk, Dvp), lambda b, qi, ki: (b, ki, 0)), # V
            ],
            out_specs=pl.BlockSpec((1, tq, Dvp), lambda b, qi, ki: (b, qi, 0)),
            scratch_shapes=[
                pltpu.VMEM((tq, 1), jnp.float32),    # running max
                pltpu.VMEM((tq, 1), jnp.float32),    # running denominator
                pltpu.VMEM((tq, Dvp), jnp.float32),  # output accumulator
            ],
        ),
        compiler_params=pltpu.CompilerParams(
            dimension_semantics=("parallel", "parallel", "arbitrary"),
            vmem_limit_bytes=32 * 1024 * 1024,  # tiles use ~2 MiB; fits v5e/v6e/v7x
        ),
    )(scale, Q, K, V)

    return out[:, :M, :Dv]


def sdpa_ref(Q, K, V, seq_len):
    s = jnp.einsum("bmd,bnd->bmn", Q, K) / (float(seq_len) ** -0.5)
    p = jax.nn.softmax(s, axis=-1)
    return jnp.einsum("bmn,bnd->bmd", p, V)


if __name__ == "__main__":
    key = jax.random.PRNGKey(0)
    kq, kk, kv = jax.random.split(key, 3)

    # small shapes consistent with the module (Q:(B,M,D), K/V:(B,N,Dv))
    B, M, N, D, Dv = 2, 8, 16, 32, 32
    Q = jax.random.normal(kq, (B, M, D), dtype=jnp.float32)
    K = jax.random.normal(kk, (B, N, D), dtype=jnp.float32)
    V = jax.random.normal(kv, (B, N, Dv), dtype=jnp.float32)

    for seq_len in (1, 9):   # same shapes -> single compile; exercises the scale
        out = jax.block_until_ready(sdpa(Q, K, V, seq_len))
        ref = sdpa_ref(Q, K, V, seq_len)
        assert out.shape == (B, M, Dv)
        assert out.dtype == jnp.float32
        # tolerance accounts for pl.reciprocal(approx=True) in the finalize
        assert jnp.allclose(out, ref, atol=5e-3, rtol=5e-3), \
            f"mismatch vs reference (seq_len={seq_len})"

    print("KERNEL_OK")
</pallas_src>

<mosaic_0001>
module attributes {stable_mosaic.version = 11 : i64} {
  func.func @_sdpa_kernel(%arg0: i32, %arg1: i32, %arg2: i32, %arg3: memref<1xf32, #tpu.memory_space<smem>>, %arg4: memref<1x8x128xf32, #tpu.memory_space<vmem>>, %arg5: memref<1x128x128xf32, #tpu.memory_space<vmem>>, %arg6: memref<1x128x128xf32, #tpu.memory_space<vmem>>, %arg7: memref<1x8x128xf32, #tpu.memory_space<vmem>>, %arg8: memref<8x1xf32, #tpu.memory_space<vmem>>, %arg9: memref<8x1xf32, #tpu.memory_space<vmem>>, %arg10: memref<8x128xf32, #tpu.memory_space<vmem>>) attributes {dimension_semantics = [#tpu.dimension_semantics<parallel>, #tpu.dimension_semantics<parallel>, #tpu.dimension_semantics<arbitrary>], iteration_bounds = array<i64: 2, 1, 1>, scalar_prefetch = 0 : i64, scratch_operands = 3 : i64, tpu.core_type = #tpu.core_type<tc>, window_params = [{transform_indices = @transform_0, window_bounds = array<i64: 1>}, {transform_indices = @transform_1, window_bounds = array<i64: 1, 8, 128>}, {transform_indices = @transform_2, window_bounds = array<i64: 1, 128, 128>}, {transform_indices = @transform_3, window_bounds = array<i64: 1, 128, 128>}, {transform_indices = @transform_4, window_bounds = array<i64: 1, 8, 128>}]} {
    %c0_i32 = arith.constant 0 : i32
    %0 = arith.cmpi eq, %arg2, %c0_i32 : i32
    %1 = arith.extui %0 : i1 to i32
    %c0_i32_0 = arith.constant 0 : i32
    %2 = arith.cmpi ne, %1, %c0_i32_0 : i32
    scf.if %2 {
      %cst_28 = arith.constant -1.000000e+30 : f32
      %46 = vector.broadcast %cst_28 : f32 to vector<8x1xf32>
      %c0_29 = arith.constant 0 : index
      %c0_30 = arith.constant 0 : index
      %47 = vector.load %arg8[%c0_29, %c0_30] : memref<8x1xf32, #tpu.memory_space<vmem>>, vector<8x1xf32>
      tpu.vector_store %arg8[%c0_29, %c0_30], %46 {strides = array<i32>} : memref<8x1xf32, #tpu.memory_space<vmem>>, vector<8x1xf32>,
      %cst_31 = arith.constant 0.000000e+00 : f32
      %48 = vector.broadcast %cst_31 : f32 to vector<8x1xf32>
      %c0_32 = arith.constant 0 : index
      %c0_33 = arith.constant 0 : index
      %49 = vector.load %arg9[%c0_32, %c0_33] : memref<8x1xf32, #tpu.memory_space<vmem>>, vector<8x1xf32>
      tpu.vector_store %arg9[%c0_32, %c0_33], %48 {strides = array<i32>} : memref<8x1xf32, #tpu.memory_space<vmem>>, vector<8x1xf32>,
      %cst_34 = arith.constant 0.000000e+00 : f32
      %50 = vector.broadcast %cst_34 : f32 to vector<8x128xf32>
      %c0_35 = arith.constant 0 : index
      %c0_36 = arith.constant 0 : index
      %51 = vector.load %arg10[%c0_35, %c0_36] : memref<8x128xf32, #tpu.memory_space<vmem>>, vector<8x128xf32>
      tpu.vector_store %arg10[%c0_35, %c0_36], %50 {strides = array<i32>} : memref<8x128xf32, #tpu.memory_space<vmem>>, vector<8x128xf32>,
    } else {
    }
    %c0 = arith.constant 0 : index
    %3 = memref.load %arg3[%c0] : memref<1xf32, #tpu.memory_space<smem>>
    %c0_1 = arith.constant 0 : index
    %c0_2 = arith.constant 0 : index
    %c0_3 = arith.constant 0 : index
    %4 = vector.load %arg4[%c0_1, %c0_2, %c0_3] : memref<1x8x128xf32, #tpu.memory_space<vmem>>, vector<1x8x128xf32>
    %5 = vector.shape_cast %4 : vector<1x8x128xf32> to vector<8x128xf32>
    %6 = vector.broadcast %3 : f32 to vector<8x128xf32>
    %7 = arith.mulf %5, %6 : vector<8x128xf32>
    %c0_4 = arith.constant 0 : index
    %c0_5 = arith.constant 0 : index
    %c0_6 = arith.constant 0 : index
    %8 = vector.load %arg5[%c0_4, %c0_5, %c0_6] : memref<1x128x128xf32, #tpu.memory_space<vmem>>, vector<1x128x128xf32>
    %9 = vector.shape_cast %8 : vector<1x128x128xf32> to vector<128x128xf32>
    %cst = arith.constant dense<0.000000e+00> : vector<8x128xf32>
    %10 = tpu.matmul %7, %9, %cst {dimension_numbers = #tpu.dot_dimension_numbers<[1], [1], [0], [0], [0, 0, 1, 0], [], []>} : vector<8x128xf32>, vector<128x128xf32>, vector<8x128xf32> -> vector<8x128xf32>
    %c128_i32 = arith.constant 128 : i32
    %11 = arith.muli %arg2, %c128_i32 : i32
    %12 = tpu.iota {dimensions = array<i32: 1>} : vector<8x128xi32>
    %13 = vector.broadcast %11 : i32 to vector<8x128xi32>
    %14 = arith.addi %13, %12 : vector<8x128xi32>
    %c16_i32 = arith.constant 16 : i32
    %15 = vector.broadcast %c16_i32 : i32 to vector<8x128xi32>
    %16 = arith.cmpi slt, %14, %15 : vector<8x128xi32>
    %cst_7 = arith.constant -1.000000e+30 : f32
    %17 = vector.broadcast %cst_7 : f32 to vector<8x128xf32>
    %18 = arith.select %16, %10, %17 : vector<8x128xi1>, vector<8x128xf32>
    %c0_8 = arith.constant 0 : index
    %c0_9 = arith.constant 0 : index
    %19 = vector.load %arg8[%c0_8, %c0_9] : memref<8x1xf32, #tpu.memory_space<vmem>>, vector<8x1xf32>
    %cst_10 = arith.constant dense<0xFF800000> : vector<8xf32>
    %20 = vector.multi_reduction <maximumf>, %18, %cst_10 [1] : vector<8x128xf32> to vector<8xf32>
    %21 = vector.shape_cast %20 : vector<8xf32> to vector<8x1xf32>
    %22 = arith.maximumf %19, %21 : vector<8x1xf32>
    %23 = arith.subf %19, %22 : vector<8x1xf32>
    %24 = math.exp %23 : vector<8x1xf32>
    %25 = vector.broadcast %22 : vector<8x1xf32> to vector<8x128xf32>
    %26 = arith.subf %18, %25 : vector<8x128xf32>
    %27 = math.exp %26 : vector<8x128xf32>
    %c0_11 = arith.constant 0 : index
    %c0_12 = arith.constant 0 : index
    %28 = vector.load %arg9[%c0_11, %c0_12] : memref<8x1xf32, #tpu.memory_space<vmem>>, vector<8x1xf32>
    %29 = arith.mulf %24, %28 : vector<8x1xf32>
    %cst_13 = arith.constant dense<0.000000e+00> : vector<8xf32>
    %30 = vector.multi_reduction <add>, %27, %cst_13 [1] : vector<8x128xf32> to vector<8xf32>
    %31 = vector.shape_cast %30 : vector<8xf32> to vector<8x1xf32>
    %32 = arith.addf %29, %31 : vector<8x1xf32>
    %c0_14 = arith.constant 0 : index
    %c0_15 = arith.constant 0 : index
    %33 = vector.load %arg9[%c0_14, %c0_15] : memref<8x1xf32, #tpu.memory_space<vmem>>, vector<8x1xf32>
    tpu.vector_store %arg9[%c0_14, %c0_15], %32 {strides = array<i32>} : memref<8x1xf32, #tpu.memory_space<vmem>>, vector<8x1xf32>,
    %c0_16 = arith.constant 0 : index
    %c0_17 = arith.constant 0 : index
    %34 = vector.load %arg10[%c0_16, %c0_17] : memref<8x128xf32, #tpu.memory_space<vmem>>, vector<8x128xf32>
    %35 = vector.broadcast %24 : vector<8x1xf32> to vector<8x128xf32>
    %36 = arith.mulf %35, %34 : vector<8x128xf32>
    %c0_18 = arith.constant 0 : index
    %c0_19 = arith.constant 0 : index
    %c0_20 = arith.constant 0 : index
    %37 = vector.load %arg6[%c0_18, %c0_19, %c0_20] : memref<1x128x128xf32, #tpu.memory_space<vmem>>, vector<1x128x128xf32>
    %38 = vector.shape_cast %37 : vector<1x128x128xf32> to vector<128x128xf32>
    %cst_21 = arith.constant dense<0.000000e+00> : vector<8x128xf32>
    %39 = tpu.matmul %27, %38, %cst_21 {dimension_numbers = #tpu.dot_dimension_numbers<[1], [0], [0], [1], [0, 0, 1, 1], [], []>} : vector<8x128xf32>, vector<128x128xf32>, vector<8x128xf32> -> vector<8x128xf32>
    %40 = arith.addf %36, %39 : vector<8x128xf32>
    %c0_22 = arith.constant 0 : index
    %c0_23 = arith.constant 0 : index
    %41 = vector.load %arg10[%c0_22, %c0_23] : memref<8x128xf32, #tpu.memory_space<vmem>>, vector<8x128xf32>
    tpu.vector_store %arg10[%c0_22, %c0_23], %40 {strides = array<i32>} : memref<8x128xf32, #tpu.memory_space<vmem>>, vector<8x128xf32>,
    %c0_24 = arith.constant 0 : index
    %c0_25 = arith.constant 0 : index
    %42 = vector.load %arg8[%c0_24, %c0_25] : memref<8x1xf32, #tpu.memory_space<vmem>>, vector<8x1xf32>
    tpu.vector_store %arg8[%c0_24, %c0_25], %22 {strides = array<i32>} : memref<8x1xf32, #tpu.memory_space<vmem>>, vector<8x1xf32>,
    %c0_i32_26 = arith.constant 0 : i32
    %43 = arith.cmpi eq, %arg2, %c0_i32_26 : i32
    %44 = arith.extui %43 : i1 to i32
    %c0_i32_27 = arith.constant 0 : i32
    %45 = arith.cmpi ne, %44, %c0_i32_27 : i32
    scf.if %45 {
      %c0_28 = arith.constant 0 : index
      %c0_29 = arith.constant 0 : index
      %46 = vector.load %arg9[%c0_28, %c0_29] : memref<8x1xf32, #tpu.memory_space<vmem>>, vector<8x1xf32>
      %47 = tpu.reciprocal %46 {approx = true} : vector<8x1xf32> -> vector<8x1xf32>
      %c0_30 = arith.constant 0 : index
      %c0_31 = arith.constant 0 : index
      %48 = vector.load %arg10[%c0_30, %c0_31] : memref<8x128xf32, #tpu.memory_space<vmem>>, vector<8x128xf32>
      %49 = vector.broadcast %47 : vector<8x1xf32> to vector<8x128xf32>
      %50 = arith.mulf %48, %49 : vector<8x128xf32>
      %c0_32 = arith.constant 0 : index
      %c0_33 = arith.constant 0 : index
      %c0_34 = arith.constant 0 : index
      %51 = vector.load %arg7[%c0_32, %c0_33, %c0_34] : memref<1x8x128xf32, #tpu.memory_space<vmem>>, vector<1x8x128xf32>
      %52 = vector.shape_cast %51 : vector<1x8x128xf32> to vector<8x128xf32>
      %53 = vector.shape_cast %50 : vector<8x128xf32> to vector<1x8x128xf32>
      tpu.vector_store %arg7[%c0_32, %c0_33, %c0_34], %53 {strides = array<i32>} : memref<1x8x128xf32, #tpu.memory_space<vmem>>, vector<1x8x128xf32>,
    } else {
    }
    return
  }
  func.func @transform_0(%arg0: i32, %arg1: i32, %arg2: i32) -> i32 {
    %c0_i32 = arith.constant 0 : i32
    %c0_i32_0 = arith.constant 0 : i32
    return %c0_i32 : i32
  }
  func.func @transform_1(%arg0: i32, %arg1: i32, %arg2: i32) -> (i32, i32, i32) {
    %c0_i32 = arith.constant 0 : i32
    %c0_i32_0 = arith.constant 0 : i32
    return %arg0, %arg1, %c0_i32 : i32, i32, i32
  }
  func.func @transform_2(%arg0: i32, %arg1: i32, %arg2: i32) -> (i32, i32, i32) {
    %c0_i32 = arith.constant 0 : i32
    %c0_i32_0 = arith.constant 0 : i32
    return %arg0, %arg2, %c0_i32 : i32, i32, i32
  }
  func.func @transform_3(%arg0: i32, %arg1: i32, %arg2: i32) -> (i32, i32, i32) {
    %c0_i32 = arith.constant 0 : i32
    %c0_i32_0 = arith.constant 0 : i32
    return %arg0, %arg2, %c0_i32 : i32, i32, i32
  }
  func.func @transform_4(%arg0: i32, %arg1: i32, %arg2: i32) -> (i32, i32, i32) {
    %c0_i32 = arith.constant 0 : i32
    %c0_i32_0 = arith.constant 0 : i32
    return %arg0, %arg1, %c0_i32 : i32, i32, i32
  }
}

</mosaic_0001>

<llo_original>
// kernel: tpu_custom_call.1
$region0: #{tpu_custom_call.1}
  #allocation0 [shape = 'u32[]', space=smem, size = 0x4, offset = 0x4, fixed_abs, tag = 'smem constant byte address 0x4 - core index']
  #allocation1 [shape = 'u32[72,128]{1,0:T(1,128)}', space=vmem, size = 0x9000, scoped, tag = 'internal scratch']
  #allocation2 [shape = 'f32[8,1]{1,0:T(8,128)}', space=vmem, size = 0x1000, scoped, tag = 'scratch operand']
  #allocation3 [shape = 'f32[8,1]{1,0:T(8,128)}', space=vmem, size = 0x1000, scoped, tag = 'scratch operand']
  #allocation4 [shape = 'f32[8,128]{1,0:T(8,128)}', space=vmem, size = 0x1000, scoped, tag = 'scratch operand']
  #allocation5 [shape = 'f32[1]{0:T(128)S(6)}', space=smem, size = 0x200, scoped, tag = 'scoped memory for tpu_custom_call.1']
  %s0 = inlined_call_operand.<no memory space> [shape: f32[1], index: 0, kind: input, shape index: {}]
  %s1 = inlined_call_operand.hbm [shape: f32[2,8,128], index: 1, kind: input, shape index: {}]
  %s2 = inlined_call_operand.hbm [shape: f32[2,128,128], index: 2, kind: input, shape index: {}]
  %s3 = inlined_call_operand.hbm [shape: f32[2,128,128], index: 3, kind: input, shape index: {}]
  %s4 = inlined_call_operand.hbm [shape: f32[2,8,128], index: 4, kind: output, shape index: {}]
  %s5 = sld [smem:[#allocation0]]
  $region69: #{tpu_custom_call.1} parent=0
    _
  %s7 = ssub.s32 1, %s5
  %s8 = scalar_select 0, %s7, %s5
  %9 = sst [smem:[#allocation5]] %s0
  $region1: #{tpu_custom_call.1} parent=0
    #allocation6 [shape = 'u8[8192]{0}', space=vmem, size = 0x2000, scoped, tag = 'input window, operand 1']
    #allocation7 [shape = 's32[2]{0}', space=sflag, size = 0x8, scoped, tag = 'scoped memory for tpu_custom_call.1']
    #allocation8 [shape = 's32[2]{0}', space=sflag, size = 0x8, scoped, tag = 'scoped memory for tpu_custom_call.1']
    #allocation9 [shape = 'u8[131072]{0}', space=vmem, size = 0x20000, scoped, tag = 'input window, operand 2']
    #allocation10 [shape = 's32[2]{0}', space=sflag, size = 0x8, scoped, tag = 'scoped memory for tpu_custom_call.1']
    #allocation11 [shape = 'u8[131072]{0}', space=vmem, size = 0x20000, scoped, tag = 'input window, operand 3']
    #allocation12 [shape = 'u8[8192]{0}', space=vmem, size = 0x2000, scoped, tag = 'output window, operand 0']
    %10 = vsyncpa [#allocation7], 0
    %s11 = scalar_lea.sflag [#allocation7], 1
    %12 = vsyncpa %s11, 0
    %13 = vsyncpa [#allocation10], 0
    %s14 = scalar_lea.sflag [#allocation10], 1
    %15 = vsyncpa %s14, 0
    %16 = vsyncpa [#allocation8], 0
    %s17 = scalar_lea.sflag [#allocation8], 1
    %18 = vsyncpa %s17, 0
    loop: start=0, step=1, limit=4
    $region2: #{tpu_custom_call.1} parent=1 // loop_pre_header
      _
    $region3: #{tpu_custom_call.1} parent=1 // loop_header
      %s20 = sphi 0, %s24
      %p21 = scmp.ge.s32.totalorder %s20, 4
      %s27 = sphi 0, %s46
      %s28 = sphi 0, %s42
      %s29 = sphi 0, %s38
      %s30 = sphi 0, %s27
      %s31 = sphi 0, %s28
      %s32 = sphi 0, %s29
      %s33 = sphi 0, %s30
      %s34 = sphi 0, %s31
      %s35 = sphi 0, %s32
      %s47 = sphi 0, %s47
      %s49 = sphi 0, %s47
      %s50 = sphi 0, %s49
      %s64 = sphi 0, %s50
      %s72 = sphi 0, %s74
      %s75 = sphi 0, %s72
      %s76 = sphi 0, %s75
      %s92 = sphi 0, %s76
      %s100 = sphi 0, %s102
      %s103 = sphi 0, %s100
      %s104 = sphi 0, %s103
      %s120 = sphi 0, %s104
      %s128 = sphi 0, %s130
      %s131 = sphi 0, %s128
      %s132 = sphi 0, %s131
      %s148 = sphi 0, %s132
      %s156 = sphi 0, %s158
      %s159 = sphi 0, %s156
      %s160 = sphi 0, %s159
      %s176 = sphi 0, %s160
    $region4: #{tpu_custom_call.1} parent=1 // loop_header_branch
      %23 = sbr.rel (%p21) target = $region8
    $region5: #{tpu_custom_call.1} parent=1 // loop_body
      %s25 = ssub.s32 %s20, 1
      %s26 = ssub.s32 %s20, 2
      %s36 = sadd.s32 1, %s29
      %p37 = scmp.ge.s32.totalorder %s36, 1
      %s38 = scalar_select %p37, 0, %s36
      %s39 = sadd.s32 1, %s28
      %s40 = scalar_select %p37, %s39, %s28
      %p41 = scmp.ge.s32.totalorder %s40, 1
      %s42 = scalar_select %p41, 0, %s40
      %s43 = sadd.s32 1, %s27
      %s44 = scalar_select %p41, %s43, %s27
      %p45 = scmp.ge.s32.totalorder %s44, 2
      %s46 = scalar_select %p45, 0, %s44
      %s48 = sadd.s32 %s47, 1
      %p51 = scmp.eq.s32.totalorder %s20, 1
      %p52 = scmp.ne.s32.totalorder %s47, %s49
      %p53 = scmp.eq.s32.totalorder %s20, 0
      %p54 = por %p52, %p53
      %p55 = scmp.ne.s32.totalorder %s47, %s49
      %p56 = scmp.eq.s32.totalorder %s25, 1
      %p57 = por %p55, %p56
      %p58 = scmp.ne.s32.totalorder %s49, %s50
      %p59 = scmp.eq.s32.totalorder %s25, 0
      %p60 = por %p58, %p59
      %p61 = scmp.ne.s32.totalorder %s49, %s50
      %p62 = scmp.eq.s32.totalorder %s26, 1
      %p63 = por %p61, %p62
      %p65 = scmp.ne.s32.totalorder %s50, %s64
      %p66 = scmp.eq.s32.totalorder %s26, 0
      %p67 = por %p65, %p66
      %s68 = ssub.s32 %s27, %s46
      %s69 = ssub.s32 %s28, %s42
      %s70 = sor.u32 %s68, %s69
      %p71 = scmp.eq.s32.totalorder %s70, 0
      %s73 = sadd.s32 %s72, 1
      %s74 = scalar_select %p71, %s72, %s73
      %p77 = pneg %p71
      %p78 = scmp.eq.s32.totalorder %s20, 1
      %p79 = por %p77, %p78
      %p80 = scmp.ne.s32.totalorder %s72, %s75
      %p81 = scmp.eq.s32.totalorder %s20, 0
      %p82 = por %p80, %p81
      %p83 = scmp.ne.s32.totalorder %s72, %s75
      %p84 = scmp.eq.s32.totalorder %s25, 1
      %p85 = por %p83, %p84
      %p86 = scmp.ne.s32.totalorder %s75, %s76
      %p87 = scmp.eq.s32.totalorder %s25, 0
      %p88 = por %p86, %p87
      %p89 = scmp.ne.s32.totalorder %s75, %s76
      %p90 = scmp.eq.s32.totalorder %s26, 1
      %p91 = por %p89, %p90
      %p93 = scmp.ne.s32.totalorder %s76, %s92
      %p94 = scmp.eq.s32.totalorder %s26, 0
      %p95 = por %p93, %p94
      %s96 = ssub.s32 %s27, %s46
      %s97 = ssub.s32 %s29, %s38
      %s98 = sor.u32 %s96, %s97
      %p99 = scmp.eq.s32.totalorder %s98, 0
      %s101 = sadd.s32 %s100, 1
      %s102 = scalar_select %p99, %s100, %s101
      %p105 = pneg %p99
      %p106 = scmp.eq.s32.totalorder %s20, 1
      %p107 = por %p105, %p106
      %p108 = scmp.ne.s32.totalorder %s100, %s103
      %p109 = scmp.eq.s32.totalorder %s20, 0
      %p110 = por %p108, %p109
      %p111 = scmp.ne.s32.totalorder %s100, %s103
      %p112 = scmp.eq.s32.totalorder %s25, 1
      %p113 = por %p111, %p112
      %p114 = scmp.ne.s32.totalorder %s103, %s104
      %p115 = scmp.eq.s32.totalorder %s25, 0
      %p116 = por %p114, %p115
      %p117 = scmp.ne.s32.totalorder %s103, %s104
      %p118 = scmp.eq.s32.totalorder %s26, 1
      %p119 = por %p117, %p118
      %p121 = scmp.ne.s32.totalorder %s104, %s120
      %p122 = scmp.eq.s32.totalorder %s26, 0
      %p123 = por %p121, %p122
      %s124 = ssub.s32 %s27, %s46
      %s125 = ssub.s32 %s29, %s38
      %s126 = sor.u32 %s124, %s125
      %p127 = scmp.eq.s32.totalorder %s126, 0
      %s129 = sadd.s32 %s128, 1
      %s130 = scalar_select %p127, %s128, %s129
      %p133 = pneg %p127
      %p134 = scmp.eq.s32.totalorder %s20, 1
      %p135 = por %p133, %p134
      %p136 = scmp.ne.s32.totalorder %s128, %s131
      %p137 = scmp.eq.s32.totalorder %s20, 0
      %p138 = por %p136, %p137
      %p139 = scmp.ne.s32.totalorder %s128, %s131
      %p140 = scmp.eq.s32.totalorder %s25, 1
      %p141 = por %p139, %p140
      %p142 = scmp.ne.s32.totalorder %s131, %s132
      %p143 = scmp.eq.s32.totalorder %s25, 0
      %p144 = por %p142, %p143
      %p145 = scmp.ne.s32.totalorder %s131, %s132
      %p146 = scmp.eq.s32.totalorder %s26, 1
      %p147 = por %p145, %p146
      %p149 = scmp.ne.s32.totalorder %s132, %s148
      %p150 = scmp.eq.s32.totalorder %s26, 0
      %p151 = por %p149, %p150
      %s152 = ssub.s32 %s27, %s46
      %s153 = ssub.s32 %s28, %s42
      %s154 = sor.u32 %s152, %s153
      %p155 = scmp.eq.s32.totalorder %s154, 0
      %s157 = sadd.s32 %s156, 1
      %s158 = scalar_select %p155, %s156, %s157
      %p161 = pneg %p155
      %p162 = scmp.eq.s32.totalorder %s20, 1
      %p163 = por %p161, %p162
      %p164 = scmp.ne.s32.totalorder %s156, %s159
      %p165 = scmp.eq.s32.totalorder %s20, 0
      %p166 = por %p164, %p165
      %p167 = scmp.ne.s32.totalorder %s156, %s159
      %p168 = scmp.eq.s32.totalorder %s25, 1
      %p169 = por %p167, %p168
      %p170 = scmp.ne.s32.totalorder %s159, %s160
      %p171 = scmp.eq.s32.totalorder %s25, 0
      %p172 = por %p170, %p171
      %p173 = scmp.ne.s32.totalorder %s159, %s160
      %p174 = scmp.eq.s32.totalorder %s26, 1
      %p175 = por %p173, %p174
      %p177 = scmp.ne.s32.totalorder %s160, %s176
      %p178 = scmp.eq.s32.totalorder %s26, 0
      %p179 = por %p177, %p178
      %p180 = scmp.le.s32.totalorder 1, %s20
      %p181 = scmp.lt.s32.totalorder %s20, 3
      %p182 = pnand %p180, %p181
      %p183 = pneg %p182
      // Predicated region
      $region9: #{tpu_custom_call.1} parent=5 // pred_check
        _
      $region10: #{tpu_custom_call.1} parent=5 // pred_check_branch
        %185 = sbr.rel (%p182) target = $region12
      $region11: #{tpu_custom_call.1} parent=5 // pred_region
        %s186 = ssub.s32 %s20, 1
        // Predicated region
        $region13: #{tpu_custom_call.1} parent=11 // pred_check
          %p187 = pneg %p60
        $region14: #{tpu_custom_call.1} parent=11 // pred_check_branch
          %189 = sbr.rel (%p187) target = $region16
        $region15: #{tpu_custom_call.1} parent=11 // pred_region
          _
        $region16: #{tpu_custom_call.1} parent=11 // pred_fallthru
          _
      $region12: #{tpu_custom_call.1} parent=5 // pred_fallthru
        _
      %p190 = scmp.lt.s32.totalorder %s20, 2
      // Predicated region
      $region17: #{tpu_custom_call.1} parent=5 // pred_check
        %p191 = pneg %p190
      $region18: #{tpu_custom_call.1} parent=5 // pred_check_branch
        %193 = sbr.rel (%p191) target = $region20
      $region19: #{tpu_custom_call.1} parent=5 // pred_region
        // Predicated region
        $region21: #{tpu_custom_call.1} parent=19 // pred_check
          %p194 = pneg %p82
        $region22: #{tpu_custom_call.1} parent=19 // pred_check_branch
          %196 = sbr.rel (%p194) target = $region24
        $region23: #{tpu_custom_call.1} parent=19 // pred_region
          %s197 = sand.u32 %s72, 1
          %s198 = scalar_lea.sflag [#allocation7], %s197
          %s199 = sand.u32 %s72, 1
          %s200 = smul.addr %s199, 8
          %s201 = scalar_lea.vmem [#allocation6], %s200
          %203 = vsyncadd %s198, 0
          %s204 = sadd.s32 %s28, %s27
          %s205 = smul.addr %s204, 8
          %s206 = scalar_lea.hbm %s1, %s205
          %s208 = sshll.u32 %s206, 4
          %s209 = int_to_ptr.hbm [resolvable:$true] %s208
          %s210 = sshll.u32 %s201, 4
          %s211 = int_to_ptr.vmem [resolvable:$true] %s210
          %213 = dma.hbm_to_vmem [thread:$0]  %s209, 128, %s211, %s198
        $region24: #{tpu_custom_call.1} parent=19 // pred_fallthru
          _
        // Predicated region
        $region25: #{tpu_custom_call.1} parent=19 // pred_check
          %p214 = pneg %p110
        $region26: #{tpu_custom_call.1} parent=19 // pred_check_branch
          %216 = sbr.rel (%p214) target = $region28
        $region27: #{tpu_custom_call.1} parent=19 // pred_region
          %s217 = sand.u32 %s20, 1
          %s218 = scalar_lea.sflag [#allocation10], %s217
          %s219 = sand.u32 %s100, 1
          %s220 = smul.addr %s219, 128
          %s221 = scalar_lea.vmem [#allocation9], %s220
          %s222 = smul.u32 16, %s29
          %224 = vsyncadd %s218, 0
          %s225 = smul.addr %s27, 16
          %s226 = sadd.s32 %s222, %s225
          %s227 = smul.addr %s226, 8
          %s228 = scalar_lea.hbm %s2, %s227
          %s229 = sshll.u32 %s228, 4
          %s230 = int_to_ptr.hbm [resolvable:$true] %s229
          %s231 = sshll.u32 %s221, 4
          %s232 = int_to_ptr.vmem [resolvable:$true] %s231
          %237 = dma.hbm_to_vmem [thread:$0]  %s230, 2048, %s232, %s218, 128, 128, 8
        $region28: #{tpu_custom_call.1} parent=19 // pred_fallthru
          _
        // Predicated region
        $region29: #{tpu_custom_call.1} parent=19 // pred_check
          %p238 = pneg %p138
        $region30: #{tpu_custom_call.1} parent=19 // pred_check_branch
          %240 = sbr.rel (%p238) target = $region32
        $region31: #{tpu_custom_call.1} parent=19 // pred_region
          %s241 = sand.u32 %s20, 1
          %s242 = scalar_lea.sflag [#allocation10], %s241
          %s243 = sand.u32 %s128, 1
          %s244 = smul.addr %s243, 128
          %s245 = scalar_lea.vmem [#allocation11], %s244
          %s246 = smul.u32 16, %s29
          %248 = vsyncadd %s242, 0
          %s249 = smul.addr %s27, 16
          %s250 = sadd.s32 %s246, %s249
          %s251 = smul.addr %s250, 8
          %s252 = scalar_lea.hbm %s3, %s251
          %s253 = sshll.u32 %s252, 4
          %s254 = int_to_ptr.hbm [resolvable:$true] %s253
          %s255 = sshll.u32 %s245, 4
          %s256 = int_to_ptr.vmem [resolvable:$true] %s255
          %261 = dma.hbm_to_vmem [thread:$0]  %s254, 2048, %s256, %s242, 128, 128, 8
        $region32: #{tpu_custom_call.1} parent=19 // pred_fallthru
          _
      $region20: #{tpu_custom_call.1} parent=5 // pred_fallthru
        _
      %p262 = scmp.le.s32.totalorder 1, %s20
      %p263 = scmp.lt.s32.totalorder %s20, 3
      %p264 = pnand %p262, %p263
      %p265 = pneg %p264
      // Predicated region
      $region33: #{tpu_custom_call.1} parent=5 // pred_check
        _
      $region34: #{tpu_custom_call.1} parent=5 // pred_check_branch
        %267 = sbr.rel (%p264) target = $region36
      $region35: #{tpu_custom_call.1} parent=5 // pred_region
        %s268 = ssub.s32 %s20, 1
        %s269 = sand.u32 %s75, 1
        %s270 = scalar_lea.sflag [#allocation7], %s269
        %s271 = sand.u32 %s75, 1
        %s272 = smul.addr %s271, 8
        %s273 = scalar_lea.vmem [#allocation6], %s272
        // Predicated region
        $region37: #{tpu_custom_call.1} parent=35 // pred_check
          %p274 = pneg %p88
        $region38: #{tpu_custom_call.1} parent=35 // pred_check_branch
          %276 = sbr.rel (%p274) target = $region40
        $region39: #{tpu_custom_call.1} parent=35 // pred_region
          %278 = dma.done %s270, 128
        $region40: #{tpu_custom_call.1} parent=35 // pred_fallthru
          _
        %s279 = sand.u32 %s25, 1
        %s280 = scalar_lea.sflag [#allocation10], %s279
        %s281 = sand.u32 %s103, 1
        %s282 = smul.addr %s281, 128
        %s283 = scalar_lea.vmem [#allocation9], %s282
        // Predicated region
        $region41: #{tpu_custom_call.1} parent=35 // pred_check
          %p284 = pneg %p116
        $region42: #{tpu_custom_call.1} parent=35 // pred_check_branch
          %286 = sbr.rel (%p284) target = $region44
        $region43: #{tpu_custom_call.1} parent=35 // pred_region
          %288 = dma.done %s280, 2048
        $region44: #{tpu_custom_call.1} parent=35 // pred_fallthru
          _
        %s289 = sand.u32 %s25, 1
        %s290 = scalar_lea.sflag [#allocation10], %s289
        %s291 = sand.u32 %s131, 1
        %s292 = smul.addr %s291, 128
        %s293 = scalar_lea.vmem [#allocation11], %s292
        // Predicated region
        $region45: #{tpu_custom_call.1} parent=35 // pred_check
          %p294 = pneg %p144
        $region46: #{tpu_custom_call.1} parent=35 // pred_check_branch
          %296 = sbr.rel (%p294) target = $region48
        $region47: #{tpu_custom_call.1} parent=35 // pred_region
          %298 = dma.done %s290, 2048
        $region48: #{tpu_custom_call.1} parent=35 // pred_fallthru
          _
        %p299 = pneg %p60
        %p300 = pneg %p57
        %s301 = sand.u32 %s75, 1
        %s302 = scalar_lea.sflag [#allocation7], %s301
        %s303 = sand.u32 %s75, 1
        %s304 = smul.addr %s303, 8
        %s305 = scalar_lea.vmem [#allocation6], %s304
        %p306 = pneg %p88
        %p307 = pneg %p85
        %s308 = sand.u32 %s25, 1
        %s309 = scalar_lea.sflag [#allocation10], %s308
        %s310 = sand.u32 %s103, 1
        %s311 = smul.addr %s310, 128
        %s312 = scalar_lea.vmem [#allocation9], %s311
        %p313 = pneg %p116
        %p314 = pneg %p113
        %s315 = sand.u32 %s25, 1
        %s316 = scalar_lea.sflag [#allocation10], %s315
        %s317 = sand.u32 %s131, 1
        %s318 = smul.addr %s317, 128
        %s319 = scalar_lea.vmem [#allocation11], %s318
        %p320 = pneg %p144
        %p321 = pneg %p141
        %p322 = pneg %p172
        %p323 = pneg %p169
        %s324 = sand.u32 %s159, 1
        %s325 = scalar_lea.sflag [#allocation8], %s324
        %s326 = sand.u32 %s159, 1
        %s327 = smul.addr %s326, 8
        %s328 = scalar_lea.vmem [#allocation12], %s327
        %s329 = smul.u32 16, %s32
        %s330 = smul.u32 16, %s32
        %p331 = scmp.eq.s32.totalorder %s32, 0
        // Predicated region
        $region49: #{tpu_custom_call.1} parent=35 // pred_check
          %p332 = pneg %p331
        $region50: #{tpu_custom_call.1} parent=35 // pred_check_branch
          %334 = sbr.rel (%p332) target = $region52
        $region51: #{tpu_custom_call.1} parent=35 // pred_region
          %vm335 = vcmask 7168
          %336 = vst.msk [vmem:[#allocation2] sm:$0xff] %vm335, -1e+30
          %337 = vst.msk [vmem:[#allocation3] sm:$0xff] %vm335, 0.0
          %338 = vst [vmem:[#allocation4] sm:$0xff] 0.0
        $region52: #{tpu_custom_call.1} parent=35 // pred_fallthru
          _
        %s339 = sld [smem:[#allocation5]]
        %v340 = vld [vmem:[%s273] sm:$0xff]
        %v341 = vstv %s339
        %v342 = vmul.f32 %v340, %v341
        %v343 = vld [vmem:[%s283] sm:$0xff]
        %v344 = vld [vmem:[%s283 + $0x8] sm:$0xff]
        %v345 = vld [vmem:[%s283 + $0x10] sm:$0xff]
        %v346 = vld [vmem:[%s283 + $0x18] sm:$0xff]
        %v347 = vld [vmem:[%s283 + $0x20] sm:$0xff]
        %v348 = vld [vmem:[%s283 + $0x28] sm:$0xff]
        %v349 = vld [vmem:[%s283 + $0x30] sm:$0xff]
        %v350 = vld [vmem:[%s283 + $0x38] sm:$0xff]
        %v351 = vld [vmem:[%s283 + $0x40] sm:$0xff]
        %v352 = vld [vmem:[%s283 + $0x48] sm:$0xff]
        %v353 = vld [vmem:[%s283 + $0x50] sm:$0xff]
        %v354 = vld [vmem:[%s283 + $0x58] sm:$0xff]
        %v355 = vld [vmem:[%s283 + $0x60] sm:$0xff]
        %v356 = vld [vmem:[%s283 + $0x68] sm:$0xff]
        %v357 = vld [vmem:[%s283 + $0x70] sm:$0xff]
        %v358 = vld [vmem:[%s283 + $0x78] sm:$0xff]
        %359 = vmatpush.xpose.msra.mxu0 %v358
        %360 = vmatpush.xpose.msra.mxu0 %v357
        %361 = vmatpush.xpose.msra.mxu0 %v356
        %362 = vmatpush.xpose.msra.mxu0 %v355
        %363 = vmatpush.xpose.msra.mxu0 %v354
        %364 = vmatpush.xpose.msra.mxu0 %v353
        %365 = vmatpush.xpose.msra.mxu0 %v352
        %366 = vmatpush.xpose.msra.mxu0 %v351
        %367 = vmatpush.xpose.msra.mxu0 %v350
        %368 = vmatpush.xpose.msra.mxu0 %v349
        %369 = vmatpush.xpose.msra.mxu0 %v348
        %370 = vmatpush.xpose.msra.mxu0 %v347
        %371 = vmatpush.xpose.msra.mxu0 %v346
        %372 = vmatpush.xpose.msra.mxu0 %v345
        %373 = vmatpush.xpose.msra.mxu0 %v344
        %374 = vmatpush.xpose.msra.mxu0 %v343
        %375 = vmatmul.f32.gmra.mxu0 %v342
        %v376 = vpop.f32.mrf.mxu0
        %v377 = vadd.f32 0.0, %v376
        %378 = vdwg.mxu0
        %s379 = smul.u32 %s32, 128
        %v380 = vlaneseq
        %v381 = vand.u32 %v380, 127
        %v382 = vstv %s379
        %v383 = vadd.s32 %v382, %v381
        %vm384 = vcmp.lt.s32.totalorder %v383, 16
        %v385 = vsel %vm384, %v377, -1e+30
        %v386 = vld [vmem:[#allocation2] sm:$0xff]
        %387 = vmax.xlane.f32.xlu0 %v385
        %v388 = vpop.xlane.xlu0 %387
        %v389 = vmax.f32 %v386, %v388
        %v390 = vsub.f32 %v386, %v389
        %v391 = vmul.f32 %v390, 1.442695
        %v392 = vpow.pop %v391
        %394 = vset.pattern.permute.xlu0 0
        %395 = vperm.xlu0 %394, %v389
        %v396 = vpop.permute.xlu0 %395
        %v398 = vsub.f32 %v385, %v396
        %v399 = vmul.f32 %v398, 1.442695
        %v400 = vpow.pop %v399
        %v401 = vld [vmem:[#allocation3] sm:$0xff]
        %v402 = vmul.f32 %v392, %v401
        %403 = vadd.xlane.f32.xlu0 %v400
        %v404 = vpop.xlane.xlu0 %403
        %v405 = vadd.f32 %v402, %v404
        %vm406 = vcmask 7168
        %407 = vst.msk [vmem:[#allocation3] sm:$0xff] %vm406, %v405
        %v408 = vld [vmem:[#allocation4] sm:$0xff]
        %410 = vset.pattern.permute.xlu0 0
        %411 = vperm.xlu0 %410, %v392
        %v412 = vpop.permute.xlu0 %411
        %v414 = vmul.f32 %v412, %v408
        %v415 = vld [vmem:[%s293] sm:$0xff]
        %v416 = vld [vmem:[%s293 + $0x8] sm:$0xff]
        %v417 = vld [vmem:[%s293 + $0x10] sm:$0xff]
        %v418 = vld [vmem:[%s293 + $0x18] sm:$0xff]
        %v419 = vld [vmem:[%s293 + $0x20] sm:$0xff]
        %v420 = vld [vmem:[%s293 + $0x28] sm:$0xff]
        %v421 = vld [vmem:[%s293 + $0x30] sm:$0xff]
        %v422 = vld [vmem:[%s293 + $0x38] sm:$0xff]
        %v423 = vld [vmem:[%s293 + $0x40] sm:$0xff]
        %v424 = vld [vmem:[%s293 + $0x48] sm:$0xff]
        %v425 = vld [vmem:[%s293 + $0x50] sm:$0xff]
        %v426 = vld [vmem:[%s293 + $0x58] sm:$0xff]
        %v427 = vld [vmem:[%s293 + $0x60] sm:$0xff]
        %v428 = vld [vmem:[%s293 + $0x68] sm:$0xff]
        %v429 = vld [vmem:[%s293 + $0x70] sm:$0xff]
        %v430 = vld [vmem:[%s293 + $0x78] sm:$0xff]
        %431 = vmatpush.msra.mxu0 %v430
        %432 = vmatpush.msra.mxu0 %v429
        %433 = vmatpush.msra.mxu0 %v428
        %434 = vmatpush.msra.mxu0 %v427
        %435 = vmatpush.msra.mxu0 %v426
        %436 = vmatpush.msra.mxu0 %v425
        %437 = vmatpush.msra.mxu0 %v424
        %438 = vmatpush.msra.mxu0 %v423
        %439 = vmatpush.msra.mxu0 %v422
        %440 = vmatpush.msra.mxu0 %v421
        %441 = vmatpush.msra.mxu0 %v420
        %442 = vmatpush.msra.mxu0 %v419
        %443 = vmatpush.msra.mxu0 %v418
        %444 = vmatpush.msra.mxu0 %v417
        %445 = vmatpush.msra.mxu0 %v416
        %446 = vmatpush.msra.mxu0 %v415
        %447 = vmatmul.f32.gmra.mxu0 %v400
        %v448 = vpop.f32.mrf.mxu0
        %v449 = vadd.f32 0.0, %v448
        %450 = vdwg.mxu0
        %v451 = vadd.f32 %v414, %v449
        %452 = vst [vmem:[#allocation4] sm:$0xff] %v451
        %453 = vst.msk [vmem:[#allocation2] sm:$0xff] %vm406, %v389
        // Predicated region
        $region53: #{tpu_custom_call.1} parent=35 // pred_check
          %p454 = pneg %p331
        $region54: #{tpu_custom_call.1} parent=35 // pred_check_branch
          %456 = sbr.rel (%p454) target = $region56
        $region55: #{tpu_custom_call.1} parent=35 // pred_region
          %v457 = vld [vmem:[#allocation3] sm:$0xff]
          %v458 = vrcp.pop %v457
          %v459 = vld [vmem:[#allocation4] sm:$0xff]
          %461 = vset.pattern.permute.xlu0 0
          %462 = vperm.xlu0 %461, %v458
          %v463 = vpop.permute.xlu0 %462
          %v465 = vmul.f32 %v459, %v463
          %466 = vst [vmem:[%s328] sm:$0xff] %v465
        $region56: #{tpu_custom_call.1} parent=35 // pred_fallthru
          _
        %s467 = sand.u32 %s159, 1
        %s468 = scalar_lea.sflag [#allocation8], %s467
        %s469 = sand.u32 %s159, 1
        %s470 = smul.addr %s469, 8
        %s471 = scalar_lea.vmem [#allocation12], %s470
        // Predicated region
        $region57: #{tpu_custom_call.1} parent=35 // pred_check
          %p472 = pneg %p169
        $region58: #{tpu_custom_call.1} parent=35 // pred_check_branch
          %474 = sbr.rel (%p472) target = $region60
        $region59: #{tpu_custom_call.1} parent=35 // pred_region
          %476 = vsyncadd %s468, 0
          %s477 = sadd.s32 %s31, %s30
          %s478 = smul.addr %s477, 8
          %s479 = scalar_lea.hbm %s4, %s478
          %s481 = sshll.u32 %s471, 4
          %s482 = int_to_ptr.vmem [resolvable:$true] %s481
          %s483 = sshll.u32 %s479, 4
          %s484 = int_to_ptr.hbm [resolvable:$true] %s483
          %486 = dma.vmem_to_hbm [thread:$0]  %s482, 128, %s484, %s468
        $region60: #{tpu_custom_call.1} parent=35 // pred_fallthru
          _
      $region36: #{tpu_custom_call.1} parent=5 // pred_fallthru
        _
      %p487 = scmp.le.s32.totalorder 2, %s20
      // Predicated region
      $region61: #{tpu_custom_call.1} parent=5 // pred_check
        %p488 = pneg %p487
      $region62: #{tpu_custom_call.1} parent=5 // pred_check_branch
        %490 = sbr.rel (%p488) target = $region64
      $region63: #{tpu_custom_call.1} parent=5 // pred_region
        %s491 = ssub.s32 %s20, 2
        // Predicated region
        $region65: #{tpu_custom_call.1} parent=63 // pred_check
          %p492 = pneg %p175
        $region66: #{tpu_custom_call.1} parent=63 // pred_check_branch
          %494 = sbr.rel (%p492) target = $region68
        $region67: #{tpu_custom_call.1} parent=63 // pred_region
          %s495 = sand.u32 %s160, 1
          %s496 = scalar_lea.sflag [#allocation8], %s495
          %s497 = sand.u32 %s160, 1
          %s498 = smul.addr %s497, 8
          %s499 = scalar_lea.vmem [#allocation12], %s498
          %501 = dma.done %s496, 128
        $region68: #{tpu_custom_call.1} parent=63 // pred_fallthru
          _
      $region64: #{tpu_custom_call.1} parent=5 // pred_fallthru
        _
    $region6: #{tpu_custom_call.1} parent=1 // loop_footer
      %s24 = sadd.s32 1, %s20
    $region7: #{tpu_custom_call.1} parent=1 // loop_footer_branch
      %19 = sbr.rel target = $region3
    $region8: #{tpu_custom_call.1} parent=1 // loop_exit
      _
    %502 = vsyncpa [#allocation7], 1
    %s503 = scalar_lea.sflag [#allocation7], 1
    %504 = vsyncpa %s503, 1
    %505 = vsyncpa [#allocation10], 1
    %s506 = scalar_lea.sflag [#allocation10], 1
    %507 = vsyncpa %s506, 1
    %508 = vsyncpa [#allocation8], 1
    %s509 = scalar_lea.sflag [#allocation8], 1
    %510 = vsyncpa %s509, 1

</llo_original>
